<compile_context>
chip_gen: v7x
topology: tpu7x:2x2x1
jax: 0.10.0
libtpu: 0.0.40
codegen_flags: <defaults>
</compile_context>

<pallas_src>
import jax
import jax.numpy as jnp
from jax.experimental import pallas as pl
from jax.experimental.pallas import tpu as pltpu


# ----------------------------------------------------------------------------
# Pallas kernel: one (net, batch-tile) block of Net.forward
# ----------------------------------------------------------------------------
def net_kernel(x_ref, wlT_ref, wg_ref, wfc1_ref, wfc2_ref, bfc_ref,
               bl_ref, bg_ref, out_ref):
    """Shapes seen by the kernel:
      x_ref   : (1, TB, Lp, D) bf16  zero-padded doc embeddings (conv pad rows +
                                     extra zero rows for sublane alignment)
      wlT_ref : (1, D, win)    bf16  local conv weight, pre-transposed
      wg_ref  : (1, L, 1)      f32   global conv weight (column layout)
      wfc1/2  : (1, D, out)    f32   FC weight halves (local / global part)
      bfc_ref : (1, 1, out)    f32   FC bias
      bl_ref  : (2, 1) SMEM    f32   local conv bias per net
      bg_ref  : (2, 1) SMEM    f32   global conv bias per net
      out_ref : (1, TB, out)   f32
    """
    n = pl.program_id(0)                       # which net: 0 = user, 1 = item
    TB, Lp, D = x_ref.shape[1], x_ref.shape[2], x_ref.shape[3]
    win = wlT_ref.shape[2]
    L = wg_ref.shape[1]
    pad = (win - 1) // 2

    x_pad = x_ref[0]                                    # (TB, Lp, D)  bf16
    xb = x_pad[:, pad:pad + L, :].astype(jnp.float32)   # (TB, L, D)   f32 VPU path

    # ---- LocalAttention: Conv2d(1,1,(win,D), padding=(pad,0)) ----
    # One MXU matmul on the padded slab, then a static band combine (no roll /
    # mask): logits[b, t] = bl + sum_k S[b, t + k, k].
    S = jnp.dot(x_pad.reshape(TB * Lp, D), wlT_ref[0],
                preferred_element_type=jnp.float32).reshape(TB, Lp, win)
    logits = bl_ref[n, 0]                               # scalar, broadcasts
    for k in range(win):                                # win is small & static
        logits = logits + S[:, k:k + L, k:k + 1]        # (TB, L, 1)

    # Softmax over the sequence axis (torch Softmax(dim=2)).
    m = jnp.max(logits, axis=1, keepdims=True)
    e = jnp.exp(logits - m)
    scores = e * pl.reciprocal(jnp.sum(e, axis=1, keepdims=True), approx=True)

    local = jnp.sum(xb * scores, axis=1)                # (TB, D)

    # ---- GlobalAttention: Conv2d(1,1,(L,1)) == weighted sum over L ----
    glob = jnp.sum(xb * wg_ref[0], axis=1) + bg_ref[n, 0]   # (TB, D)

    # ---- FC head (dropout = identity at eval); concat folded into 2 matmuls
    out = (jnp.dot(local, wfc1_ref[0], preferred_element_type=jnp.float32)
           + jnp.dot(glob, wfc2_ref[0], preferred_element_type=jnp.float32)
           + bfc_ref[0])
    out_ref[0] = out.astype(out_ref.dtype)


# ----------------------------------------------------------------------------
# Wrapper: fused user_net + item_net Net.forward via a single pallas_call
# ----------------------------------------------------------------------------
def dattn_nets_forward(x_user, x_item, user_params, item_params):
    """x_user, x_item: (B, L, D) float32.  Returns (user_fea, item_fea), (B, out)."""
    B, L, D = x_user.shape
    win = user_params["wl"].shape[0]
    pad = (win - 1) // 2
    out_size = user_params["bfc"].shape[-1]

    # Batch tile: whole batch for small B; 64-sample tiles for large B
    # (keeps the VMEM footprint bounded — important on v7x's 64 MiB VMEM).
    if B <= 64:
        TB = B
    else:
        TB = 64
        assert B % TB == 0, "pad the batch to a multiple of 64 for large B"
    nb = B // TB

    # Padded sequence length: covers the conv zero padding and rounds up to a
    # multiple of 16 so bf16 sublane packing / in-kernel reshape stays aligned.
    Lp = ((L + 2 * pad + 15) // 16) * 16

    # Stack the two nets along a leading axis; pre-pack weights host-side.
    x_all = jnp.stack([x_user, x_item], axis=0)                        # (2,B,L,D)
    x_pad = jnp.pad(x_all, ((0, 0), (0, 0), (pad, Lp - L - pad), (0, 0)))
    x_pad = x_pad.astype(jnp.bfloat16)                                 # bf16 DMA/MXU

    def stack(name):
        return jnp.stack([user_params[name], item_params[name]], axis=0)

    wlT = jnp.transpose(stack("wl"), (0, 2, 1)).astype(jnp.bfloat16)   # (2,D,win)
    wg = stack("wg").reshape(2, L, 1)                                  # (2,L,1) f32
    wfcT = stack("wfcT")                                               # (2,2D,out)
    wfc1 = wfcT[:, :D, :]                                              # (2,D,out)
    wfc2 = wfcT[:, D:, :]                                              # (2,D,out)
    bfc = stack("bfc")                                                 # (2,1,out)
    bl = stack("bl").reshape(2, 1)
    bg = stack("bg").reshape(2, 1)

    out = pl.pallas_call(
        net_kernel,
        out_shape=jax.ShapeDtypeStruct((2, B, out_size), jnp.float32),
        grid=(2, nb),
        in_specs=[
            pl.BlockSpec((1, TB, Lp, D), lambda n, b: (n, b, 0, 0)),       # x (padded)
            pl.BlockSpec((1, D, win), lambda n, b: (n, 0, 0)),             # local conv W^T
            pl.BlockSpec((1, L, 1), lambda n, b: (n, 0, 0)),               # global conv W
            pl.BlockSpec((1, D, out_size), lambda n, b: (n, 0, 0)),        # fc W (local half)
            pl.BlockSpec((1, D, out_size), lambda n, b: (n, 0, 0)),        # fc W (global half)
            pl.BlockSpec((1, 1, out_size), lambda n, b: (n, 0, 0)),        # fc bias
            pl.BlockSpec(memory_space=pltpu.MemorySpace.SMEM),             # local conv bias
            pl.BlockSpec(memory_space=pltpu.MemorySpace.SMEM),             # global conv bias
        ],
        out_specs=pl.BlockSpec((1, TB, out_size), lambda n, b: (n, b, 0)),
        compiler_params=pltpu.CompilerParams(
            dimension_semantics=("parallel", "parallel")),
    )(x_pad, wlT, wg, wfc1, wfc2, bfc, bl, bg)

    return out[0], out[1]


# ----------------------------------------------------------------------------
# Pure-JAX f32 reference of Net.forward (for correctness check only)
# ----------------------------------------------------------------------------
def net_ref(x, p):
    B, L, D = x.shape
    win = p["wl"].shape[0]
    pad = (win - 1) // 2
    xpad = jnp.pad(x, ((0, 0), (pad, pad), (0, 0)))
    logits = jnp.stack(
        [jnp.einsum("bkd,kd->b", xpad[:, t:t + win, :], p["wl"]) for t in range(L)],
        axis=1) + p["bl"][0, 0]                             # (B, L)
    scores = jax.nn.softmax(logits, axis=1)
    local = jnp.einsum("btd,bt->bd", x, scores)             # (B, D)
    glob = jnp.einsum("btd,t->bd", x, p["wg"][0]) + p["bg"][0, 0]
    cat = jnp.concatenate([local, glob], axis=1)            # (B, 2D)
    return cat @ p["wfcT"] + p["bfc"]


# ----------------------------------------------------------------------------
# Deterministic parameter init (shapes follow the PyTorch module __init__)
# ----------------------------------------------------------------------------
def init_net_params(key, L, D, win, out_size):
    ks = jax.random.split(key, 6)
    fan_l = win * D                                   # xavier_uniform for (1,1,win,D)
    bnd_l = (6.0 / (2.0 * fan_l)) ** 0.5
    bnd_g = (6.0 / (2.0 * L)) ** 0.5                  # xavier_uniform for (1,1,L,1)
    return {
        "wl": jax.random.uniform(ks[0], (win, D), jnp.float32, -bnd_l, bnd_l),
        "bl": jax.random.uniform(ks[1], (1, 1), jnp.float32, -0.1, 0.1),
        "wg": jax.random.uniform(ks[2], (1, L), jnp.float32, -bnd_g, bnd_g),
        "bg": jax.random.uniform(ks[3], (1, 1), jnp.float32, -0.1, 0.1),
        "wfcT": jax.random.uniform(ks[4], (2 * D, out_size), jnp.float32, -0.1, 0.1),
        "bfc": jax.random.uniform(ks[5], (1, out_size), jnp.float32, -0.1, 0.1),
    }


if __name__ == "__main__":
    # Small, module-consistent config
    num_users, num_items = 10, 12
    max_doc_len, word_embed_dim = 16, 32
    ctx_win_size, output_size, vocab_size = 5, 8, 50
    B = 2

    key = jax.random.PRNGKey(0)
    ks = jax.random.split(key, 8)

    # Frozen embedding tables (doc tables hold word ids stored as floats,
    # matching the .long() cast in the PyTorch forward).
    uid_userDoc = jax.random.randint(ks[0], (num_users, max_doc_len), 0, vocab_size).astype(jnp.float32)
    iid_itemDoc = jax.random.randint(ks[1], (num_items, max_doc_len), 0, vocab_size).astype(jnp.float32)
    wid_wEmbed = jax.random.normal(ks[2], (vocab_size, word_embed_dim), jnp.float32)

    user_params = init_net_params(ks[3], max_doc_len, word_embed_dim, ctx_win_size, output_size)
    item_params = init_net_params(ks[4], max_doc_len, word_embed_dim, ctx_win_size, output_size)

    batch_uid = jnp.array([1, 3], dtype=jnp.int32)
    batch_iid = jnp.array([0, 5], dtype=jnp.int32)

    # ---- DAttn.forward glue (embedding gathers stay in plain JAX) ----
    batch_userDoc = uid_userDoc[batch_uid]                             # (B, L) float
    batch_itemDoc = iid_itemDoc[batch_iid]                             # (B, L) float
    batch_userDocEmbed = wid_wEmbed[batch_userDoc.astype(jnp.int32)]   # (B, L, D)
    batch_itemDocEmbed = wid_wEmbed[batch_itemDoc.astype(jnp.int32)]   # (B, L, D)

    # ---- Fused Pallas kernel: user_net + item_net forward in one call ----
    batch_userFea, batch_itemFea = dattn_nets_forward(
        batch_userDocEmbed, batch_itemDocEmbed, user_params, item_params)
    jax.block_until_ready((batch_userFea, batch_itemFea))

    # ---- correctness check against pure-JAX f32 reference ----
    ref_u = net_ref(batch_userDocEmbed, user_params)
    ref_i = net_ref(batch_itemDocEmbed, item_params)
    # bf16 input rounding in the kernel is intentional -> slightly relaxed tol.
    assert jnp.allclose(batch_userFea, ref_u, rtol=3e-2, atol=3e-2), "user net mismatch"
    assert jnp.allclose(batch_itemFea, ref_i, rtol=3e-2, atol=3e-2), "item net mismatch"

    # TODO(synk): DAttn_RatingPred definition not provided in the source module;
    # the script returns the per-user / per-item Net features instead of a rating.
    print("KERNEL_OK")
</pallas_src>

<mosaic_0001>
module attributes {stable_mosaic.version = 11 : i64} {
  func.func @net_kernel(%arg0: i32, %arg1: i32, %arg2: memref<1x2x32x32xbf16, #tpu.memory_space<vmem>>, %arg3: memref<1x32x5xbf16, #tpu.memory_space<vmem>>, %arg4: memref<1x16x1xf32, #tpu.memory_space<vmem>>, %arg5: memref<1x32x8xf32, #tpu.memory_space<vmem>>, %arg6: memref<1x32x8xf32, #tpu.memory_space<vmem>>, %arg7: memref<1x1x8xf32, #tpu.memory_space<vmem>>, %arg8: memref<2x1xf32, #tpu.memory_space<smem>>, %arg9: memref<2x1xf32, #tpu.memory_space<smem>>, %arg10: memref<1x2x8xf32, #tpu.memory_space<vmem>>) attributes {dimension_semantics = [#tpu.dimension_semantics<parallel>, #tpu.dimension_semantics<parallel>], iteration_bounds = array<i64: 2, 1>, scalar_prefetch = 0 : i64, scratch_operands = 0 : i64, tpu.core_type = #tpu.core_type<tc>, window_params = [{transform_indices = @transform_0, window_bounds = array<i64: 1, 2, 32, 32>}, {transform_indices = @transform_1, window_bounds = array<i64: 1, 32, 5>}, {transform_indices = @transform_2, window_bounds = array<i64: 1, 16, 1>}, {transform_indices = @transform_3, window_bounds = array<i64: 1, 32, 8>}, {transform_indices = @transform_4, window_bounds = array<i64: 1, 32, 8>}, {transform_indices = @transform_5, window_bounds = array<i64: 1, 1, 8>}, {transform_indices = @transform_6, window_bounds = array<i64: 2, 1>}, {transform_indices = @transform_7, window_bounds = array<i64: 2, 1>}, {transform_indices = @transform_8, window_bounds = array<i64: 1, 2, 8>}]} {
    %c0 = arith.constant 0 : index
    %c0_0 = arith.constant 0 : index
    %c0_1 = arith.constant 0 : index
    %c0_2 = arith.constant 0 : index
    %0 = vector.load %arg2[%c0, %c0_0, %c0_1, %c0_2] : memref<1x2x32x32xbf16, #tpu.memory_space<vmem>>, vector<1x2x32x32xbf16>
    %1 = vector.shape_cast %0 : vector<1x2x32x32xbf16> to vector<2x32x32xbf16>
    %2 = vector.extract_strided_slice %1 {offsets = [0, 2, 0], sizes = [2, 16, 32], strides = [1, 1, 1]} : vector<2x32x32xbf16> to vector<2x16x32xbf16>
    %3 = arith.extf %2 : vector<2x16x32xbf16> to vector<2x16x32xf32>
    %4 = vector.shape_cast %1 : vector<2x32x32xbf16> to vector<64x32xbf16>
    %c0_3 = arith.constant 0 : index
    %c0_4 = arith.constant 0 : index
    %c0_5 = arith.constant 0 : index
    %5 = vector.load %arg3[%c0_3, %c0_4, %c0_5] : memref<1x32x5xbf16, #tpu.memory_space<vmem>>, vector<1x32x5xbf16>
    %6 = vector.shape_cast %5 : vector<1x32x5xbf16> to vector<32x5xbf16>
    %cst = arith.constant dense<0.000000e+00> : vector<64x5xf32>
    %7 = tpu.matmul %4, %6, %cst {dimension_numbers = #tpu.dot_dimension_numbers<[1], [0], [0], [1], [0, 0, 1, 1], [], []>} : vector<64x32xbf16>, vector<32x5xbf16>, vector<64x5xf32> -> vector<64x5xf32>
    %8 = vector.shape_cast %7 : vector<64x5xf32> to vector<2x32x5xf32>
    %9 = arith.index_cast %arg0 : i32 to index
    %c0_6 = arith.constant 0 : index
    %10 = memref.load %arg8[%9, %c0_6] : memref<2x1xf32, #tpu.memory_space<smem>>
    %11 = vector.extract_strided_slice %8 {offsets = [0, 0, 0], sizes = [2, 16, 1], strides = [1, 1, 1]} : vector<2x32x5xf32> to vector<2x16x1xf32>
    %12 = vector.broadcast %10 : f32 to vector<2x16x1xf32>
    %13 = arith.addf %12, %11 : vector<2x16x1xf32>
    %14 = vector.extract_strided_slice %8 {offsets = [0, 1, 1], sizes = [2, 16, 1], strides = [1, 1, 1]} : vector<2x32x5xf32> to vector<2x16x1xf32>
    %15 = arith.addf %13, %14 : vector<2x16x1xf32>
    %16 = vector.extract_strided_slice %8 {offsets = [0, 2, 2], sizes = [2, 16, 1], strides = [1, 1, 1]} : vector<2x32x5xf32> to vector<2x16x1xf32>
    %17 = arith.addf %15, %16 : vector<2x16x1xf32>
    %18 = vector.extract_strided_slice %8 {offsets = [0, 3, 3], sizes = [2, 16, 1], strides = [1, 1, 1]} : vector<2x32x5xf32> to vector<2x16x1xf32>
    %19 = arith.addf %17, %18 : vector<2x16x1xf32>
    %20 = vector.extract_strided_slice %8 {offsets = [0, 4, 4], sizes = [2, 16, 1], strides = [1, 1, 1]} : vector<2x32x5xf32> to vector<2x16x1xf32>
    %21 = arith.addf %19, %20 : vector<2x16x1xf32>
    %cst_7 = arith.constant dense<0xFF800000> : vector<2x1xf32>
    %22 = vector.multi_reduction <maximumf>, %21, %cst_7 [1] : vector<2x16x1xf32> to vector<2x1xf32>
    %23 = vector.shape_cast %22 : vector<2x1xf32> to vector<2x1x1xf32>
    %24 = vector.broadcast %23 : vector<2x1x1xf32> to vector<2x16x1xf32>
    %25 = arith.subf %21, %24 : vector<2x16x1xf32>
    %26 = math.exp %25 : vector<2x16x1xf32>
    %cst_8 = arith.constant dense<0.000000e+00> : vector<2x1xf32>
    %27 = vector.multi_reduction <add>, %26, %cst_8 [1] : vector<2x16x1xf32> to vector<2x1xf32>
    %28 = vector.shape_cast %27 : vector<2x1xf32> to vector<2x1x1xf32>
    %29 = tpu.reciprocal %28 {approx = true} : vector<2x1x1xf32> -> vector<2x1x1xf32>
    %30 = vector.broadcast %29 : vector<2x1x1xf32> to vector<2x16x1xf32>
    %31 = arith.mulf %26, %30 : vector<2x16x1xf32>
    %32 = vector.broadcast %31 : vector<2x16x1xf32> to vector<2x16x32xf32>
    %33 = arith.mulf %3, %32 : vector<2x16x32xf32>
    %cst_9 = arith.constant dense<0.000000e+00> : vector<2x32xf32>
    %34 = vector.multi_reduction <add>, %33, %cst_9 [1] : vector<2x16x32xf32> to vector<2x32xf32>
    %c0_10 = arith.constant 0 : index
    %c0_11 = arith.constant 0 : index
    %c0_12 = arith.constant 0 : index
    %35 = vector.load %arg4[%c0_10, %c0_11, %c0_12] : memref<1x16x1xf32, #tpu.memory_space<vmem>>, vector<1x16x1xf32>
    %36 = vector.shape_cast %35 : vector<1x16x1xf32> to vector<16x1xf32>
    %37 = vector.shape_cast %36 : vector<16x1xf32> to vector<1x16x1xf32>
    %38 = vector.broadcast %37 : vector<1x16x1xf32> to vector<2x16x32xf32>
    %39 = arith.mulf %3, %38 : vector<2x16x32xf32>
    %cst_13 = arith.constant dense<0.000000e+00> : vector<2x32xf32>
    %40 = vector.multi_reduction <add>, %39, %cst_13 [1] : vector<2x16x32xf32> to vector<2x32xf32>
    %41 = arith.index_cast %arg0 : i32 to index
    %c0_14 = arith.constant 0 : index
    %42 = memref.load %arg9[%41, %c0_14] : memref<2x1xf32, #tpu.memory_space<smem>>
    %43 = vector.broadcast %42 : f32 to vector<2x32xf32>
    %44 = arith.addf %40, %43 : vector<2x32xf32>
    %c0_15 = arith.constant 0 : index
    %c0_16 = arith.constant 0 : index
    %c0_17 = arith.constant 0 : index
    %45 = vector.load %arg5[%c0_15, %c0_16, %c0_17] : memref<1x32x8xf32, #tpu.memory_space<vmem>>, vector<1x32x8xf32>
    %46 = vector.shape_cast %45 : vector<1x32x8xf32> to vector<32x8xf32>
    %cst_18 = arith.constant dense<0.000000e+00> : vector<2x8xf32>
    %47 = tpu.matmul %34, %46, %cst_18 {dimension_numbers = #tpu.dot_dimension_numbers<[1], [0], [0], [1], [0, 0, 1, 1], [], []>} : vector<2x32xf32>, vector<32x8xf32>, vector<2x8xf32> -> vector<2x8xf32>
    %c0_19 = arith.constant 0 : index
    %c0_20 = arith.constant 0 : index
    %c0_21 = arith.constant 0 : index
    %48 = vector.load %arg6[%c0_19, %c0_20, %c0_21] : memref<1x32x8xf32, #tpu.memory_space<vmem>>, vector<1x32x8xf32>
    %49 = vector.shape_cast %48 : vector<1x32x8xf32> to vector<32x8xf32>
    %cst_22 = arith.constant dense<0.000000e+00> : vector<2x8xf32>
    %50 = tpu.matmul %44, %49, %cst_22 {dimension_numbers = #tpu.dot_dimension_numbers<[1], [0], [0], [1], [0, 0, 1, 1], [], []>} : vector<2x32xf32>, vector<32x8xf32>, vector<2x8xf32> -> vector<2x8xf32>
    %51 = arith.addf %47, %50 : vector<2x8xf32>
    %c0_23 = arith.constant 0 : index
    %c0_24 = arith.constant 0 : index
    %c0_25 = arith.constant 0 : index
    %52 = vector.load %arg7[%c0_23, %c0_24, %c0_25] : memref<1x1x8xf32, #tpu.memory_space<vmem>>, vector<1x1x8xf32>
    %53 = vector.shape_cast %52 : vector<1x1x8xf32> to vector<1x8xf32>
    %54 = vector.broadcast %53 : vector<1x8xf32> to vector<2x8xf32>
    %55 = arith.addf %51, %54 : vector<2x8xf32>
    %c0_26 = arith.constant 0 : index
    %c0_27 = arith.constant 0 : index
    %c0_28 = arith.constant 0 : index
    %56 = vector.load %arg10[%c0_26, %c0_27, %c0_28] : memref<1x2x8xf32, #tpu.memory_space<vmem>>, vector<1x2x8xf32>
    %57 = vector.shape_cast %56 : vector<1x2x8xf32> to vector<2x8xf32>
    %58 = vector.shape_cast %55 : vector<2x8xf32> to vector<1x2x8xf32>
    tpu.vector_store %arg10[%c0_26, %c0_27, %c0_28], %58 {strides = array<i32>} : memref<1x2x8xf32, #tpu.memory_space<vmem>>, vector<1x2x8xf32>,
    return
  }
  func.func @transform_0(%arg0: i32, %arg1: i32) -> (i32, i32, i32, i32) {
    %c0_i32 = arith.constant 0 : i32
    %c0_i32_0 = arith.constant 0 : i32
    %c0_i32_1 = arith.constant 0 : i32
    return %arg0, %arg1, %c0_i32, %c0_i32_0 : i32, i32, i32, i32
  }
  func.func @transform_1(%arg0: i32, %arg1: i32) -> (i32, i32, i32) {
    %c0_i32 = arith.constant 0 : i32
    %c0_i32_0 = arith.constant 0 : i32
    %c0_i32_1 = arith.constant 0 : i32
    return %arg0, %c0_i32, %c0_i32_0 : i32, i32, i32
  }
  func.func @transform_2(%arg0: i32, %arg1: i32) -> (i32, i32, i32) {
    %c0_i32 = arith.constant 0 : i32
    %c0_i32_0 = arith.constant 0 : i32
    %c0_i32_1 = arith.constant 0 : i32
    return %arg0, %c0_i32, %c0_i32_0 : i32, i32, i32
  }
  func.func @transform_3(%arg0: i32, %arg1: i32) -> (i32, i32, i32) {
    %c0_i32 = arith.constant 0 : i32
    %c0_i32_0 = arith.constant 0 : i32
    %c0_i32_1 = arith.constant 0 : i32
    return %arg0, %c0_i32, %c0_i32_0 : i32, i32, i32
  }
  func.func @transform_4(%arg0: i32, %arg1: i32) -> (i32, i32, i32) {
    %c0_i32 = arith.constant 0 : i32
    %c0_i32_0 = arith.constant 0 : i32
    %c0_i32_1 = arith.constant 0 : i32
    return %arg0, %c0_i32, %c0_i32_0 : i32, i32, i32
  }
  func.func @transform_5(%arg0: i32, %arg1: i32) -> (i32, i32, i32) {
    %c0_i32 = arith.constant 0 : i32
    %c0_i32_0 = arith.constant 0 : i32
    %c0_i32_1 = arith.constant 0 : i32
    return %arg0, %c0_i32, %c0_i32_0 : i32, i32, i32
  }
  func.func @transform_6(%arg0: i32, %arg1: i32) -> (i32, i32) {
    %c0_i32 = arith.constant 0 : i32
    %c0_i32_0 = arith.constant 0 : i32
    %c0_i32_1 = arith.constant 0 : i32
    return %c0_i32, %c0_i32_0 : i32, i32
  }
  func.func @transform_7(%arg0: i32, %arg1: i32) -> (i32, i32) {
    %c0_i32 = arith.constant 0 : i32
    %c0_i32_0 = arith.constant 0 : i32
    %c0_i32_1 = arith.constant 0 : i32
    return %c0_i32, %c0_i32_0 : i32, i32
  }
  func.func @transform_8(%arg0: i32, %arg1: i32) -> (i32, i32, i32) {
    %c0_i32 = arith.constant 0 : i32
    %c0_i32_0 = arith.constant 0 : i32
    return %arg0, %arg1, %c0_i32 : i32, i32, i32
  }
}

</mosaic_0001>

<llo_original>
// kernel: tpu_custom_call.1
$region0: #{tpu_custom_call.1}
  #allocation0 [shape = 'u32[]', space=smem, size = 0x4, offset = 0x4, fixed_abs, tag = 'smem constant byte address 0x4 - core index']
  #allocation1 [shape = 'u32[144,128]{1,0:T(1,128)}', space=vmem, size = 0x12000, scoped, tag = 'internal scratch']
  %s0 = inlined_call_operand.vmem [shape: bf16[2,2,32,32], index: 0, kind: input, shape index: {}]
  %s1 = inlined_call_operand.vmem [shape: bf16[2,32,5], index: 1, kind: input, shape index: {}]
  %s2 = inlined_call_operand.vmem [shape: f32[2,16,1], index: 2, kind: input, shape index: {}]
  %s3 = inlined_call_operand.vmem [shape: f32[2,32,8], index: 3, kind: input, shape index: {}]
  %s4 = inlined_call_operand.vmem [shape: f32[2,32,8], index: 4, kind: input, shape index: {}]
  %s5 = inlined_call_operand.vmem [shape: f32[2,1,8], index: 5, kind: input, shape index: {}]
  %s6 = inlined_call_operand.vmem [shape: f32[2,1], index: 6, kind: input, shape index: {}]
  %s7 = inlined_call_operand.vmem [shape: f32[2,1], index: 7, kind: input, shape index: {}]
  %s8 = inlined_call_operand.hbm [shape: f32[2,2,8], index: 8, kind: output, shape index: {}]
  %s9 = sld [smem:[#allocation0]]
  $region73: #{tpu_custom_call.1} parent=0
    _
  %s11 = ssub.s32 1, %s9
  %s12 = scalar_select 0, %s11, %s9
  $region1: #{tpu_custom_call.1} parent=0
    #allocation2 [shape = 'u8[1024]{0}', space=smem, size = 0x400, scoped, tag = 'input window, operand 6, single buffered']
    #allocation3 [shape = 's32[2]{0}', space=sflag, size = 0x8, scoped, tag = 'scoped memory for tpu_custom_call.1']
    #allocation4 [shape = 's32[2]{0}', space=sflag, size = 0x8, scoped, tag = 'scoped memory for tpu_custom_call.1']
    #allocation5 [shape = 'u8[1024]{0}', space=smem, size = 0x400, scoped, tag = 'input window, operand 7, single buffered']
    #allocation6 [shape = 's32[1]{0}', space=sflag, size = 0x4, scoped, tag = 'scoped memory for tpu_custom_call.1']
    #allocation7 [shape = 'u8[2048]{0}', space=vmem, size = 0x800, scoped, tag = 'output window, operand 0']
    %13 = vsyncpa [#allocation4], 0
    %14 = vsyncpa [#allocation6], 0
    %15 = vsyncpa [#allocation3], 0
    %s16 = scalar_lea.sflag [#allocation3], 1
    %17 = vsyncpa %s16, 0
    loop: start=0, step=1, limit=4
    $region2: #{tpu_custom_call.1} parent=1 // loop_pre_header
      _
    $region3: #{tpu_custom_call.1} parent=1 // loop_header
      %s19 = sphi 0, %s23
      %p20 = scmp.ge.s32.totalorder %s19, 4
      %s26 = sphi 0, %s38
      %s27 = sphi 0, %s34
      %s28 = sphi 0, %s26
      %s29 = sphi 0, %s27
      %s30 = sphi 0, %s28
      %s31 = sphi 0, %s29
      %s43 = sphi 0, %s45
      %s46 = sphi 0, %s43
      %s47 = sphi 0, %s46
      %s63 = sphi 0, %s47
      %s69 = sphi 0, %s71
      %s72 = sphi 0, %s69
      %s73 = sphi 0, %s72
      %s89 = sphi 0, %s73
      %s95 = sphi 0, %s97
      %s98 = sphi 0, %s95
      %s99 = sphi 0, %s98
      %s115 = sphi 0, %s99
      %s121 = sphi 0, %s123
      %s124 = sphi 0, %s121
      %s125 = sphi 0, %s124
      %s141 = sphi 0, %s125
      %s147 = sphi 0, %s149
      %s150 = sphi 0, %s147
      %s151 = sphi 0, %s150
      %s167 = sphi 0, %s151
      %s173 = sphi 0, %s175
      %s176 = sphi 0, %s173
      %s177 = sphi 0, %s176
      %s193 = sphi 0, %s177
      %s197 = sphi 0, %s197
      %s199 = sphi 0, %s197
      %s200 = sphi 0, %s199
      %s214 = sphi 0, %s200
      %s218 = sphi 0, %s218
      %s220 = sphi 0, %s218
      %s221 = sphi 0, %s220
      %s235 = sphi 0, %s221
      %s243 = sphi 0, %s245
      %s246 = sphi 0, %s243
      %s247 = sphi 0, %s246
      %s263 = sphi 0, %s247
    $region4: #{tpu_custom_call.1} parent=1 // loop_header_branch
      %22 = sbr.rel (%p20) target = $region8
    $region5: #{tpu_custom_call.1} parent=1 // loop_body
      %s24 = ssub.s32 %s19, 1
      %s25 = ssub.s32 %s19, 2
      %s32 = sadd.s32 1, %s27
      %p33 = scmp.ge.s32.totalorder %s32, 1
      %s34 = scalar_select %p33, 0, %s32
      %s35 = sadd.s32 1, %s26
      %s36 = scalar_select %p33, %s35, %s26
      %p37 = scmp.ge.s32.totalorder %s36, 2
      %s38 = scalar_select %p37, 0, %s36
      %s39 = ssub.s32 %s26, %s38
      %s40 = ssub.s32 %s27, %s34
      %s41 = sor.u32 %s39, %s40
      %p42 = scmp.eq.s32.totalorder %s41, 0
      %s44 = sadd.s32 %s43, 1
      %s45 = scalar_select %p42, %s43, %s44
      %p48 = pneg %p42
      %p49 = scmp.eq.s32.totalorder %s19, 1
      %p50 = por %p48, %p49
      %p51 = scmp.ne.s32.totalorder %s43, %s46
      %p52 = scmp.eq.s32.totalorder %s19, 0
      %p53 = por %p51, %p52
      %p54 = scmp.ne.s32.totalorder %s43, %s46
      %p55 = scmp.eq.s32.totalorder %s24, 1
      %p56 = por %p54, %p55
      %p57 = scmp.ne.s32.totalorder %s46, %s47
      %p58 = scmp.eq.s32.totalorder %s24, 0
      %p59 = por %p57, %p58
      %p60 = scmp.ne.s32.totalorder %s46, %s47
      %p61 = scmp.eq.s32.totalorder %s25, 1
      %p62 = por %p60, %p61
      %p64 = scmp.ne.s32.totalorder %s47, %s63
      %p65 = scmp.eq.s32.totalorder %s25, 0
      %p66 = por %p64, %p65
      %s67 = ssub.s32 %s26, %s38
      %p68 = scmp.eq.s32.totalorder %s67, 0
      %s70 = sadd.s32 %s69, 1
      %s71 = scalar_select %p68, %s69, %s70
      %p74 = pneg %p68
      %p75 = scmp.eq.s32.totalorder %s19, 1
      %p76 = por %p74, %p75
      %p77 = scmp.ne.s32.totalorder %s69, %s72
      %p78 = scmp.eq.s32.totalorder %s19, 0
      %p79 = por %p77, %p78
      %p80 = scmp.ne.s32.totalorder %s69, %s72
      %p81 = scmp.eq.s32.totalorder %s24, 1
      %p82 = por %p80, %p81
      %p83 = scmp.ne.s32.totalorder %s72, %s73
      %p84 = scmp.eq.s32.totalorder %s24, 0
      %p85 = por %p83, %p84
      %p86 = scmp.ne.s32.totalorder %s72, %s73
      %p87 = scmp.eq.s32.totalorder %s25, 1
      %p88 = por %p86, %p87
      %p90 = scmp.ne.s32.totalorder %s73, %s89
      %p91 = scmp.eq.s32.totalorder %s25, 0
      %p92 = por %p90, %p91
      %s93 = ssub.s32 %s26, %s38
      %p94 = scmp.eq.s32.totalorder %s93, 0
      %s96 = sadd.s32 %s95, 1
      %s97 = scalar_select %p94, %s95, %s96
      %p100 = pneg %p94
      %p101 = scmp.eq.s32.totalorder %s19, 1
      %p102 = por %p100, %p101
      %p103 = scmp.ne.s32.totalorder %s95, %s98
      %p104 = scmp.eq.s32.totalorder %s19, 0
      %p105 = por %p103, %p104
      %p106 = scmp.ne.s32.totalorder %s95, %s98
      %p107 = scmp.eq.s32.totalorder %s24, 1
      %p108 = por %p106, %p107
      %p109 = scmp.ne.s32.totalorder %s98, %s99
      %p110 = scmp.eq.s32.totalorder %s24, 0
      %p111 = por %p109, %p110
      %p112 = scmp.ne.s32.totalorder %s98, %s99
      %p113 = scmp.eq.s32.totalorder %s25, 1
      %p114 = por %p112, %p113
      %p116 = scmp.ne.s32.totalorder %s99, %s115
      %p117 = scmp.eq.s32.totalorder %s25, 0
      %p118 = por %p116, %p117
      %s119 = ssub.s32 %s26, %s38
      %p120 = scmp.eq.s32.totalorder %s119, 0
      %s122 = sadd.s32 %s121, 1
      %s123 = scalar_select %p120, %s121, %s122
      %p126 = pneg %p120
      %p127 = scmp.eq.s32.totalorder %s19, 1
      %p128 = por %p126, %p127
      %p129 = scmp.ne.s32.totalorder %s121, %s124
      %p130 = scmp.eq.s32.totalorder %s19, 0
      %p131 = por %p129, %p130
      %p132 = scmp.ne.s32.totalorder %s121, %s124
      %p133 = scmp.eq.s32.totalorder %s24, 1
      %p134 = por %p132, %p133
      %p135 = scmp.ne.s32.totalorder %s124, %s125
      %p136 = scmp.eq.s32.totalorder %s24, 0
      %p137 = por %p135, %p136
      %p138 = scmp.ne.s32.totalorder %s124, %s125
      %p139 = scmp.eq.s32.totalorder %s25, 1
      %p140 = por %p138, %p139
      %p142 = scmp.ne.s32.totalorder %s125, %s141
      %p143 = scmp.eq.s32.totalorder %s25, 0
      %p144 = por %p142, %p143
      %s145 = ssub.s32 %s26, %s38
      %p146 = scmp.eq.s32.totalorder %s145, 0
      %s148 = sadd.s32 %s147, 1
      %s149 = scalar_select %p146, %s147, %s148
      %p152 = pneg %p146
      %p153 = scmp.eq.s32.totalorder %s19, 1
      %p154 = por %p152, %p153
      %p155 = scmp.ne.s32.totalorder %s147, %s150
      %p156 = scmp.eq.s32.totalorder %s19, 0
      %p157 = por %p155, %p156
      %p158 = scmp.ne.s32.totalorder %s147, %s150
      %p159 = scmp.eq.s32.totalorder %s24, 1
      %p160 = por %p158, %p159
      %p161 = scmp.ne.s32.totalorder %s150, %s151
      %p162 = scmp.eq.s32.totalorder %s24, 0
      %p163 = por %p161, %p162
      %p164 = scmp.ne.s32.totalorder %s150, %s151
      %p165 = scmp.eq.s32.totalorder %s25, 1
      %p166 = por %p164, %p165
      %p168 = scmp.ne.s32.totalorder %s151, %s167
      %p169 = scmp.eq.s32.totalorder %s25, 0
      %p170 = por %p168, %p169
      %s171 = ssub.s32 %s26, %s38
      %p172 = scmp.eq.s32.totalorder %s171, 0
      %s174 = sadd.s32 %s173, 1
      %s175 = scalar_select %p172, %s173, %s174
      %p178 = pneg %p172
      %p179 = scmp.eq.s32.totalorder %s19, 1
      %p180 = por %p178, %p179
      %p181 = scmp.ne.s32.totalorder %s173, %s176
      %p182 = scmp.eq.s32.totalorder %s19, 0
      %p183 = por %p181, %p182
      %p184 = scmp.ne.s32.totalorder %s173, %s176
      %p185 = scmp.eq.s32.totalorder %s24, 1
      %p186 = por %p184, %p185
      %p187 = scmp.ne.s32.totalorder %s176, %s177
      %p188 = scmp.eq.s32.totalorder %s24, 0
      %p189 = por %p187, %p188
      %p190 = scmp.ne.s32.totalorder %s176, %s177
      %p191 = scmp.eq.s32.totalorder %s25, 1
      %p192 = por %p190, %p191
      %p194 = scmp.ne.s32.totalorder %s177, %s193
      %p195 = scmp.eq.s32.totalorder %s25, 0
      %p196 = por %p194, %p195
      %s198 = sadd.s32 %s197, 1
      %p201 = scmp.eq.s32.totalorder %s19, 1
      %p202 = scmp.ne.s32.totalorder %s197, %s199
      %p203 = scmp.eq.s32.totalorder %s19, 0
      %p204 = por %p202, %p203
      %p205 = scmp.ne.s32.totalorder %s197, %s199
      %p206 = scmp.eq.s32.totalorder %s24, 1
      %p207 = por %p205, %p206
      %p208 = scmp.ne.s32.totalorder %s199, %s200
      %p209 = scmp.eq.s32.totalorder %s24, 0
      %p210 = por %p208, %p209
      %p211 = scmp.ne.s32.totalorder %s199, %s200
      %p212 = scmp.eq.s32.totalorder %s25, 1
      %p213 = por %p211, %p212
      %p215 = scmp.ne.s32.totalorder %s200, %s214
      %p216 = scmp.eq.s32.totalorder %s25, 0
      %p217 = por %p215, %p216
      %s219 = sadd.s32 %s218, 1
      %p222 = scmp.eq.s32.totalorder %s19, 1
      %p223 = scmp.ne.s32.totalorder %s218, %s220
      %p224 = scmp.eq.s32.totalorder %s19, 0
      %p225 = por %p223, %p224
      %p226 = scmp.ne.s32.totalorder %s218, %s220
      %p227 = scmp.eq.s32.totalorder %s24, 1
      %p228 = por %p226, %p227
      %p229 = scmp.ne.s32.totalorder %s220, %s221
      %p230 = scmp.eq.s32.totalorder %s24, 0
      %p231 = por %p229, %p230
      %p232 = scmp.ne.s32.totalorder %s220, %s221
      %p233 = scmp.eq.s32.totalorder %s25, 1
      %p234 = por %p232, %p233
      %p236 = scmp.ne.s32.totalorder %s221, %s235
      %p237 = scmp.eq.s32.totalorder %s25, 0
      %p238 = por %p236, %p237
      %s239 = ssub.s32 %s26, %s38
      %s240 = ssub.s32 %s27, %s34
      %s241 = sor.u32 %s239, %s240
      %p242 = scmp.eq.s32.totalorder %s241, 0
      %s244 = sadd.s32 %s243, 1
      %s245 = scalar_select %p242, %s243, %s244
      %p248 = pneg %p242
      %p249 = scmp.eq.s32.totalorder %s19, 1
      %p250 = por %p248, %p249
      %p251 = scmp.ne.s32.totalorder %s243, %s246
      %p252 = scmp.eq.s32.totalorder %s19, 0
      %p253 = por %p251, %p252
      %p254 = scmp.ne.s32.totalorder %s243, %s246
      %p255 = scmp.eq.s32.totalorder %s24, 1
      %p256 = por %p254, %p255
      %p257 = scmp.ne.s32.totalorder %s246, %s247
      %p258 = scmp.eq.s32.totalorder %s24, 0
      %p259 = por %p257, %p258
      %p260 = scmp.ne.s32.totalorder %s246, %s247
      %p261 = scmp.eq.s32.totalorder %s25, 1
      %p262 = por %p260, %p261
      %p264 = scmp.ne.s32.totalorder %s247, %s263
      %p265 = scmp.eq.s32.totalorder %s25, 0
      %p266 = por %p264, %p265
      %p267 = scmp.le.s32.totalorder 1, %s19
      %p268 = scmp.lt.s32.totalorder %s19, 3
      %p269 = pnand %p267, %p268
      %p270 = pneg %p269
      // Predicated region
      $region9: #{tpu_custom_call.1} parent=5 // pred_check
        _
      $region10: #{tpu_custom_call.1} parent=5 // pred_check_branch
        %272 = sbr.rel (%p269) target = $region12
      $region11: #{tpu_custom_call.1} parent=5 // pred_region
        %s273 = ssub.s32 %s19, 1
        // Predicated region
        $region13: #{tpu_custom_call.1} parent=11 // pred_check
          %p274 = pneg %p210
        $region14: #{tpu_custom_call.1} parent=11 // pred_check_branch
          %276 = sbr.rel (%p274) target = $region16
        $region15: #{tpu_custom_call.1} parent=11 // pred_region
          %s278 = ssub.s32 32, 32
          %279 = vsyncadd [#allocation4], %s278
          %s281 = sshll.u32 %s6, 4
          %s282 = int_to_ptr.vmem [resolvable:$true] %s281
          %284 = dma.vmem_to_smem %s282, 32, [#allocation2], [#allocation4]
        $region16: #{tpu_custom_call.1} parent=11 // pred_fallthru
          _
        // Predicated region
        $region17: #{tpu_custom_call.1} parent=11 // pred_check
          %p285 = pneg %p231
        $region18: #{tpu_custom_call.1} parent=11 // pred_check_branch
          %287 = sbr.rel (%p285) target = $region20
        $region19: #{tpu_custom_call.1} parent=11 // pred_region
          %s289 = ssub.s32 32, 32
          %290 = vsyncadd [#allocation6], %s289
          %s292 = sshll.u32 %s7, 4
          %s293 = int_to_ptr.vmem [resolvable:$true] %s292
          %295 = dma.vmem_to_smem %s293, 32, [#allocation5], [#allocation6]
        $region20: #{tpu_custom_call.1} parent=11 // pred_fallthru
          _
      $region12: #{tpu_custom_call.1} parent=5 // pred_fallthru
        _
      %p296 = scmp.lt.s32.totalorder %s19, 2
      // Predicated region
      $region21: #{tpu_custom_call.1} parent=5 // pred_check
        %p297 = pneg %p296
      $region22: #{tpu_custom_call.1} parent=5 // pred_check_branch
        %299 = sbr.rel (%p297) target = $region24
      $region23: #{tpu_custom_call.1} parent=5 // pred_region
        // Predicated region
        $region25: #{tpu_custom_call.1} parent=23 // pred_check
          %p300 = pneg %p53
        $region26: #{tpu_custom_call.1} parent=23 // pred_check_branch
          %302 = sbr.rel (%p300) target = $region28
        $region27: #{tpu_custom_call.1} parent=23 // pred_region
          %s303 = smul.u32 2, %s27
          %p304 = scmp.lt.s32.totalorder %s26, 1
          %s305 = scalar_select %p304, %s26, 1
          %p306 = scmp.lt.s32.totalorder %s303, 1
          %s307 = scalar_select %p306, %s303, 1
          %s308 = smul.addr %s307, 4
          %s309 = smul.addr %s305, 8
          %s310 = sadd.s32 %s308, %s309
          %s311 = smul.addr %s310, 4
          %s312 = scalar_lea.vmem %s0, %s311
          %s313 = smul.u32 2, %s27
        $region28: #{tpu_custom_call.1} parent=23 // pred_fallthru
          _
        // Predicated region
        $region29: #{tpu_custom_call.1} parent=23 // pred_check
          %p314 = pneg %p79
        $region30: #{tpu_custom_call.1} parent=23 // pred_check_branch
          %316 = sbr.rel (%p314) target = $region32
        $region31: #{tpu_custom_call.1} parent=23 // pred_region
          %p317 = scmp.lt.s32.totalorder %s26, 1
          %s318 = scalar_select %p317, %s26, 1
          %s319 = smul.addr %s318, 4
          %s320 = smul.addr %s319, 4
          %s321 = scalar_lea.vmem %s1, %s320
        $region32: #{tpu_custom_call.1} parent=23 // pred_fallthru
          _
        // Predicated region
        $region33: #{tpu_custom_call.1} parent=23 // pred_check
          %p322 = pneg %p105
        $region34: #{tpu_custom_call.1} parent=23 // pred_check_branch
          %324 = sbr.rel (%p322) target = $region36
        $region35: #{tpu_custom_call.1} parent=23 // pred_region
          %p325 = scmp.lt.s32.totalorder %s26, 1
          %s326 = scalar_select %p325, %s26, 1
          %s327 = smul.addr %s326, 2
          %s328 = smul.addr %s327, 8
          %s329 = scalar_lea.vmem %s2, %s328
        $region36: #{tpu_custom_call.1} parent=23 // pred_fallthru
          _
        // Predicated region
        $region37: #{tpu_custom_call.1} parent=23 // pred_check
          %p330 = pneg %p131
        $region38: #{tpu_custom_call.1} parent=23 // pred_check_branch
          %332 = sbr.rel (%p330) target = $region40
        $region39: #{tpu_custom_call.1} parent=23 // pred_region
          %p333 = scmp.lt.s32.totalorder %s26, 1
          %s334 = scalar_select %p333, %s26, 1
          %s335 = smul.addr %s334, 4
          %s336 = smul.addr %s335, 8
          %s337 = scalar_lea.vmem %s3, %s336
        $region40: #{tpu_custom_call.1} parent=23 // pred_fallthru
          _
        // Predicated region
        $region41: #{tpu_custom_call.1} parent=23 // pred_check
          %p338 = pneg %p157
        $region42: #{tpu_custom_call.1} parent=23 // pred_check_branch
          %340 = sbr.rel (%p338) target = $region44
        $region43: #{tpu_custom_call.1} parent=23 // pred_region
          %p341 = scmp.lt.s32.totalorder %s26, 1
          %s342 = scalar_select %p341, %s26, 1
          %s343 = smul.addr %s342, 4
          %s344 = smul.addr %s343, 8
          %s345 = scalar_lea.vmem %s4, %s344
        $region44: #{tpu_custom_call.1} parent=23 // pred_fallthru
          _
        // Predicated region
        $region45: #{tpu_custom_call.1} parent=23 // pred_check
          %p346 = pneg %p183
        $region46: #{tpu_custom_call.1} parent=23 // pred_check_branch
          %348 = sbr.rel (%p346) target = $region48
        $region47: #{tpu_custom_call.1} parent=23 // pred_region
          %p349 = scmp.lt.s32.totalorder %s26, 1
          %s350 = scalar_select %p349, %s26, 1
          %s351 = scalar_lea.vmem %s5, %s350
        $region48: #{tpu_custom_call.1} parent=23 // pred_fallthru
          _
      $region24: #{tpu_custom_call.1} parent=5 // pred_fallthru
        _
      %p352 = scmp.le.s32.totalorder 1, %s19
      %p353 = scmp.lt.s32.totalorder %s19, 3
      %p354 = pnand %p352, %p353
      %p355 = pneg %p354
      // Predicated region
      $region49: #{tpu_custom_call.1} parent=5 // pred_check
        _
      $region50: #{tpu_custom_call.1} parent=5 // pred_check_branch
        %357 = sbr.rel (%p354) target = $region52
      $region51: #{tpu_custom_call.1} parent=5 // pred_region
        %s358 = ssub.s32 %s19, 1
        // Predicated region
        $region53: #{tpu_custom_call.1} parent=51 // pred_check
          %p359 = pneg %p210
        $region54: #{tpu_custom_call.1} parent=51 // pred_check_branch
          %361 = sbr.rel (%p359) target = $region56
        $region55: #{tpu_custom_call.1} parent=51 // pred_region
          %362 = dma.done [#allocation4], 32
        $region56: #{tpu_custom_call.1} parent=51 // pred_fallthru
          _
        // Predicated region
        $region57: #{tpu_custom_call.1} parent=51 // pred_check
          %p363 = pneg %p231
        $region58: #{tpu_custom_call.1} parent=51 // pred_check_branch
          %365 = sbr.rel (%p363) target = $region60
        $region59: #{tpu_custom_call.1} parent=51 // pred_region
          %366 = dma.done [#allocation6], 32
        $region60: #{tpu_custom_call.1} parent=51 // pred_fallthru
          _
        %367 = sfence
        %s368 = smul.u32 2, %s29
        %p369 = scmp.lt.s32.totalorder %s28, 1
        %s370 = scalar_select %p369, %s28, 1
        %p371 = scmp.lt.s32.totalorder %s368, 1
        %s372 = scalar_select %p371, %s368, 1
        %s373 = smul.addr %s372, 4
        %s374 = smul.addr %s370, 8
        %s375 = sadd.s32 %s373, %s374
        %s376 = smul.addr %s375, 4
        %s377 = scalar_lea.vmem %s0, %s376
        %p378 = pneg %p59
        %p379 = pneg %p56
        %p380 = scmp.lt.s32.totalorder %s28, 1
        %s381 = scalar_select %p380, %s28, 1
        %s382 = smul.addr %s381, 4
        %s383 = smul.addr %s382, 4
        %s384 = scalar_lea.vmem %s1, %s383
        %p385 = pneg %p85
        %p386 = pneg %p82
        %p387 = scmp.lt.s32.totalorder %s28, 1
        %s388 = scalar_select %p387, %s28, 1
        %s389 = smul.addr %s388, 2
        %s390 = smul.addr %s389, 8
        %s391 = scalar_lea.vmem %s2, %s390
        %p392 = pneg %p111
        %p393 = pneg %p108
        %p394 = scmp.lt.s32.totalorder %s28, 1
        %s395 = scalar_select %p394, %s28, 1
        %s396 = smul.addr %s395, 4
        %s397 = smul.addr %s396, 8
        %s398 = scalar_lea.vmem %s3, %s397
        %p399 = pneg %p137
        %p400 = pneg %p134
        %p401 = scmp.lt.s32.totalorder %s28, 1
        %s402 = scalar_select %p401, %s28, 1
        %s403 = smul.addr %s402, 4
        %s404 = smul.addr %s403, 8
        %s405 = scalar_lea.vmem %s4, %s404
        %p406 = pneg %p163
        %p407 = pneg %p160
        %p408 = scmp.lt.s32.totalorder %s28, 1
        %s409 = scalar_select %p408, %s28, 1
        %s410 = scalar_lea.vmem %s5, %s409
        %p411 = pneg %p189
        %p412 = pneg %p186
        %p413 = pneg %p210
        %p414 = pneg %p207
        %p415 = pneg %p231
        %p416 = pneg %p228
        %p417 = pneg %p259
        %p418 = pneg %p256
        %s419 = sand.u32 %s246, 1
        %s420 = scalar_lea.sflag [#allocation3], %s419
        %s421 = sand.u32 %s246, 1
        %s422 = smul.addr %s421, 2
        %s423 = scalar_lea.vmem [#allocation7], %s422
        %s424 = smul.u32 2, %s29
        %p425 = scmp.lt.s32.totalorder %s28, 1
        %s426 = scalar_select %p425, %s28, 1
        %p427 = scmp.lt.s32.totalorder %s424, 1
        %s428 = scalar_select %p427, %s424, 1
        %s429 = smul.addr %s428, 4
        %s430 = smul.addr %s426, 8
        %s431 = sadd.s32 %s429, %s430
        %s432 = smul.addr %s431, 4
        %s433 = scalar_lea.vmem %s0, %s432
        %s434 = smul.u32 2, %s29
        %p435 = scmp.lt.s32.totalorder %s28, 1
        %s436 = scalar_select %p435, %s28, 1
        %s437 = smul.addr %s436, 4
        %s438 = smul.addr %s437, 4
        %s439 = scalar_lea.vmem %s1, %s438
        %p440 = scmp.lt.s32.totalorder %s28, 1
        %s441 = scalar_select %p440, %s28, 1
        %s442 = smul.addr %s441, 2
        %s443 = smul.addr %s442, 8
        %s444 = scalar_lea.vmem %s2, %s443
        %p445 = scmp.lt.s32.totalorder %s28, 1
        %s446 = scalar_select %p445, %s28, 1
        %s447 = smul.addr %s446, 4
        %s448 = smul.addr %s447, 8
        %s449 = scalar_lea.vmem %s3, %s448
        %p450 = scmp.lt.s32.totalorder %s28, 1
        %s451 = scalar_select %p450, %s28, 1
        %s452 = smul.addr %s451, 4
        %s453 = smul.addr %s452, 8
        %s454 = scalar_lea.vmem %s4, %s453
        %p455 = scmp.lt.s32.totalorder %s28, 1
        %s456 = scalar_select %p455, %s28, 1
        %s457 = scalar_lea.vmem %s5, %s456
        %v459 = vld [vmem:[%s433] sm:$0xf]
        %v460 = vld [vmem:[%s433 + $0x4] sm:$0xf]
        %v461 = vld [vmem:[%s433 + $0x8] sm:$0xf]
        %v462 = vld [vmem:[%s433 + $0xc] sm:$0xf]
        %v463 = vld [vmem:[%s433 + $0x10] sm:$0xf]
        %v464 = vld [vmem:[%s433 + $0x14] sm:$0xf]
        %v465 = vld [vmem:[%s433 + $0x18] sm:$0xf]
        %v466 = vld [vmem:[%s433 + $0x1c] sm:$0xf]
        %v467 = vunpack.c.l.bf16 %v459
        %v468 = vunpack.c.l.bf16 %v460
        %v469 = vunpack.c.l.bf16 %v461
        %v470 = vunpack.c.l.bf16 %v463
        %v471 = vunpack.c.l.bf16 %v464
        %v472 = vunpack.c.l.bf16 %v465
        %v473 = vld [vmem:[%s439] sm:$0xf]
        %v474 = vld [vmem:[%s439 + $0x4] sm:$0xf]
        %v475 = vld [vmem:[%s439 + $0x8] sm:$0xf]
        %v476 = vld [vmem:[%s439 + $0xc] sm:$0xf]
        %v485 = vunpack.c.l.b16 %v459
        %v486 = vunpack.c.l.b16 %v460
        %v487 = vunpack.c.l.b16 %v461
        %v488 = vunpack.c.l.b16 %v462
        %v489 = vunpack.c.l.b16 %v463
        %v490 = vunpack.c.l.b16 %v464
        %v491 = vunpack.c.l.b16 %v465
        %v492 = vunpack.c.l.b16 %v466
        %v493 = vpack.c.b16 %v486, %v485
        %v494 = vpack.c.b16 %v488, %v487
        %v495 = vpack.c.b16 %v490, %v489
        %v496 = vpack.c.b16 %v492, %v491
        %v501 = vunpack.c.l.b16 %v473
        %v502 = vunpack.c.l.b16 %v474
        %v503 = vunpack.c.l.b16 %v475
        %v504 = vunpack.c.l.b16 %v476
        %v505 = vpack.c.b16 %v502, %v501
        %v506 = vpack.c.b16 %v504, %v503
        %vm509 = vcmask 261120
        %v511 = vsel %vm509, %v493, 0
        %v514 = vsel %vm509, %v494, 0
        %v517 = vsel %vm509, %v495, 0
        %v520 = vsel %vm509, %v496, 0
        %522 = vmatprep.subr.bf16.mxu0 0
        %523 = vmatpush1.bf16.msra.mxu0 %v505
        %524 = vmatprep.subr.bf16.mxu0 0
        %525 = vmatpush1.bf16.msra.mxu0 %v506
        %526 = vmatprep.subr.bf16.mxu0 0
        %527 = vmatpush1.bf16.msra.mxu0 0
        %528 = vmatprep.subr.bf16.mxu0 0
        %529 = vmatpush1.bf16.msra.mxu0 0
        %530 = vmatprep.subr.bf16.mxu0 0
        %531 = vmatpush1.bf16.msra.mxu0 0
        %532 = vmatprep.subr.bf16.mxu0 0
        %533 = vmatpush1.bf16.msra.mxu0 0
        %534 = vmatprep.subr.bf16.mxu0 0
        %535 = vmatpush1.bf16.msra.mxu0 0
        %536 = vmatprep.subr.bf16.mxu0 0
        %537 = vmatpush1.bf16.msra.mxu0 0
        %538 = vmatprep.subr.bf16.mxu0 0
        %539 = vmatpush1.bf16.msra.mxu0 0
        %540 = vmatprep.subr.bf16.mxu0 0
        %541 = vmatpush1.bf16.msra.mxu0 0
        %542 = vmatprep.subr.bf16.mxu0 0
        %543 = vmatpush1.bf16.msra.mxu0 0
        %544 = vmatprep.subr.bf16.mxu0 0
        %545 = vmatpush1.bf16.msra.mxu0 0
        %546 = vmatprep.subr.bf16.mxu0 0
        %547 = vmatpush1.bf16.msra.mxu0 0
        %548 = vmatprep.subr.bf16.mxu0 0
        %549 = vmatpush1.bf16.msra.mxu0 0
        %550 = vmatprep.subr.bf16.mxu0 0
        %551 = vmatpush1.bf16.msra.mxu0 0
        %552 = vmatprep.subr.bf16.mxu0 0
        %553 = vmatpush1.bf16.msra.mxu0 0
        %554 = vmatprep.mubr.bf16.mxu0 0
        %555 = vmatmul.mubr.bf16.gmra.mrb[0].mxu0 %v511
        %v556 = vpop.f32.mrb[0].mxu0
        %v557 = vadd.f32 0.0, %v556
        %v558 = vpop.f32.mrb[0].mxu0
        %v559 = vpop.f32.mrb[0].mxu0
        %v560 = vadd.f32 0.0, %v559
        %v561 = vpop.f32.mrb[0].mxu0
        %562 = vmatprep.mubr.bf16.mxu0 0
        %563 = vmatmul.mubr.bf16.gmra.mrb[0].mxu0 %v514
        %v564 = vpop.f32.mrb[0].mxu0
        %v565 = vadd.f32 0.0, %v564
        %v566 = vpop.f32.mrb[0].mxu0
        %v567 = vpop.f32.mrb[0].mxu0
        %v568 = vpop.f32.mrb[0].mxu0
        %569 = vmatprep.mubr.bf16.mxu0 0
        %570 = vmatmul.mubr.bf16.gmra.mrb[0].mxu0 %v517
        %v571 = vpop.f32.mrb[0].mxu0
        %v572 = vadd.f32 0.0, %v571
        %v573 = vpop.f32.mrb[0].mxu0
        %v574 = vpop.f32.mrb[0].mxu0
        %v575 = vadd.f32 0.0, %v574
        %v576 = vpop.f32.mrb[0].mxu0
        %577 = vmatprep.mubr.bf16.mxu0 0
        %578 = vmatmul.mubr.bf16.gmra.mrb[0].mxu0 %v520
        %v579 = vpop.f32.mrb[0].mxu0
        %v580 = vadd.f32 0.0, %v579
        %v581 = vpop.f32.mrb[0].mxu0
        %v582 = vpop.f32.mrb[0].mxu0
        %v583 = vpop.f32.mrb[0].mxu0
        %584 = vdwg.mxu0
        %s585 = smul.u32 %s28, 128
        %s586 = sld [smem:[#allocation2 + %s585]]
        %v587 = vstv %s586
        %v588 = vadd.f32 %v587, %v557
        %v589 = vadd.f32 %v587, %v560
        %v590 = vadd.f32 %v587, %v572
        %v591 = vadd.f32 %v587, %v575
        %vm598 = vcmask 1046528
        %v599 = vrot.slane %v557, 1
        %v600 = vrot.slane %v560, 1
        %v601 = vsel %vm598, %v599, %v600
        %v602 = vrot.slane %v565, 1
        %v603 = vsel %vm598, %v600, %v602
        %v604 = vrot.slane %v572, 1
        %v605 = vrot.slane %v575, 1
        %v606 = vsel %vm598, %v604, %v605
        %v607 = vrot.slane %v580, 1
        %v608 = vsel %vm598, %v605, %v607
        %609 = vrot.lane.b32.xlu0 %v601, 127
        %v610 = vpop.permute.xlu0 %609
        %611 = vrot.lane.b32.xlu0 %v603, 127
        %v612 = vpop.permute.xlu0 %611
        %613 = vrot.lane.b32.xlu0 %v606, 127
        %v614 = vpop.permute.xlu0 %613
        %615 = vrot.lane.b32.xlu0 %v608, 127
        %v616 = vpop.permute.xlu0 %615
        %v621 = vadd.f32 %v588, %v610
        %v622 = vadd.f32 %v589, %v612
        %v623 = vadd.f32 %v590, %v614
        %v624 = vadd.f32 %v591, %v616
        %vm625 = vcmask 1045504
        %v626 = vrot.slane %v557, 2
        %v627 = vrot.slane %v560, 2
        %v628 = vsel %vm625, %v626, %v627
        %v629 = vrot.slane %v565, 2
        %v630 = vsel %vm625, %v627, %v629
        %v631 = vrot.slane %v572, 2
        %v632 = vrot.slane %v575, 2
        %v633 = vsel %vm625, %v631, %v632
        %v634 = vrot.slane %v580, 2
        %v635 = vsel %vm625, %v632, %v634
        %636 = vrot.lane.b32.xlu0 %v628, 126
        %v637 = vpop.permute.xlu0 %636
        %638 = vrot.lane.b32.xlu0 %v630, 126
        %v639 = vpop.permute.xlu0 %638
        %640 = vrot.lane.b32.xlu0 %v633, 126
        %v641 = vpop.permute.xlu0 %640
        %642 = vrot.lane.b32.xlu0 %v635, 126
        %v643 = vpop.permute.xlu0 %642
        %v648 = vadd.f32 %v621, %v637
        %v649 = vadd.f32 %v622, %v639
        %v650 = vadd.f32 %v623, %v641
        %v651 = vadd.f32 %v624, %v643
        %vm652 = vcmask 1044480
        %v653 = vrot.slane %v557, 3
        %v654 = vrot.slane %v560, 3
        %v655 = vsel %vm652, %v653, %v654
        %v656 = vrot.slane %v565, 3
        %v657 = vsel %vm652, %v654, %v656
        %v658 = vrot.slane %v572, 3
        %v659 = vrot.slane %v575, 3
        %v660 = vsel %vm652, %v658, %v659
        %v661 = vrot.slane %v580, 3
        %v662 = vsel %vm652, %v659, %v661
        %663 = vrot.lane.b32.xlu0 %v655, 125
        %v664 = vpop.permute.xlu0 %663
        %665 = vrot.lane.b32.xlu0 %v657, 125
        %v666 = vpop.permute.xlu0 %665
        %667 = vrot.lane.b32.xlu0 %v660, 125
        %v668 = vpop.permute.xlu0 %667
        %669 = vrot.lane.b32.xlu0 %v662, 125
        %v670 = vpop.permute.xlu0 %669
        %v675 = vadd.f32 %v648, %v664
        %v676 = vadd.f32 %v649, %v666
        %v677 = vadd.f32 %v650, %v668
        %v678 = vadd.f32 %v651, %v670
        %vm679 = vcmask 1043456
        %v680 = vrot.slane %v557, 4
        %v681 = vrot.slane %v560, 4
        %v682 = vsel %vm679, %v680, %v681
        %v683 = vrot.slane %v565, 4
        %v684 = vsel %vm679, %v681, %v683
        %v685 = vrot.slane %v572, 4
        %v686 = vrot.slane %v575, 4
        %v687 = vsel %vm679, %v685, %v686
        %v688 = vrot.slane %v580, 4
        %v689 = vsel %vm679, %v686, %v688
        %690 = vrot.lane.b32.xlu0 %v682, 124
        %v691 = vpop.permute.xlu0 %690
        %692 = vrot.lane.b32.xlu0 %v684, 124
        %v693 = vpop.permute.xlu0 %692
        %694 = vrot.lane.b32.xlu0 %v687, 124
        %v695 = vpop.permute.xlu0 %694
        %696 = vrot.lane.b32.xlu0 %v689, 124
        %v697 = vpop.permute.xlu0 %696
        %v702 = vadd.f32 %v675, %v691
        %v703 = vadd.f32 %v676, %v693
        %v704 = vadd.f32 %v677, %v695
        %v705 = vadd.f32 %v678, %v697
        %vm706 = vcmask 7168
        %v707 = vsel %vm706, %v702, -inf
        %v708 = vsel %vm706, %v703, -inf
        %v709 = vmax.f32 %v707, %v708
        %v710 = vrot.slane %v709, 4
        %v711 = vmax.f32 %v709, %v710
        %v712 = vrot.slane %v711, 2
        %v713 = vmax.f32 %v711, %v712
        %v714 = vrot.slane %v713, 1
        %v715 = vmax.f32 %v713, %v714
        %v716 = vsel %vm706, %v704, -inf
        %v717 = vsel %vm706, %v705, -inf
        %v718 = vmax.f32 %v716, %v717
        %v719 = vrot.slane %v718, 4
        %v720 = vmax.f32 %v718, %v719
        %v721 = vrot.slane %v720, 2
        %v722 = vmax.f32 %v720, %v721
        %v723 = vrot.slane %v722, 1
        %v724 = vmax.f32 %v722, %v723
        %v725 = vsub.f32 %v702, %v715
        %v726 = vsub.f32 %v703, %v715
        %v727 = vsub.f32 %v704, %v724
        %v728 = vsub.f32 %v705, %v724
        %v729 = vmul.f32 %v725, 1.442695
        %v730 = vpow.pop %v729
        %v731 = vmul.f32 %v726, 1.442695
        %v732 = vpow.pop %v731
        %v733 = vmul.f32 %v727, 1.442695
        %v734 = vpow.pop %v733
        %v735 = vmul.f32 %v728, 1.442695
        %v736 = vpow.pop %v735
        %v737 = vsel %vm706, %v730, 0.0
        %v738 = vsel %vm706, %v732, 0.0
        %v739 = vadd.f32 %v737, %v738
        %v740 = vrot.slane %v739, 4
        %v741 = vadd.f32 %v739, %v740
        %v742 = vrot.slane %v741, 2
        %v743 = vadd.f32 %v741, %v742
        %v744 = vrot.slane %v743, 1
        %v745 = vadd.f32 %v743, %v744
        %v746 = vsel %vm706, %v734, 0.0
        %v747 = vsel %vm706, %v736, 0.0
        %v748 = vadd.f32 %v746, %v747
        %v749 = vrot.slane %v748, 4
        %v750 = vadd.f32 %v748, %v749
        %v751 = vrot.slane %v750, 2
        %v752 = vadd.f32 %v750, %v751
        %v753 = vrot.slane %v752, 1
        %v754 = vadd.f32 %v752, %v753
        %v755 = vrcp.pop %v745
        %v756 = vrcp.pop %v754
        %v757 = vmul.f32 %v730, %v755
        %v758 = vmul.f32 %v732, %v755
        %v759 = vmul.f32 %v734, %v756
        %v760 = vmul.f32 %v736, %v756
        %762 = vset.pattern.permute.xlu0 0
        %763 = vperm.xlu0 %762, %v757
        %v764 = vpop.permute.xlu0 %763
        %766 = vset.pattern.permute.xlu0 0
        %767 = vperm.xlu0 %766, %v758
        %v768 = vpop.permute.xlu0 %767
        %770 = vset.pattern.permute.xlu0 0
        %771 = vperm.xlu0 %770, %v759
        %v772 = vpop.permute.xlu0 %771
        %774 = vset.pattern.permute.xlu0 0
        %775 = vperm.xlu0 %774, %v760
        %v776 = vpop.permute.xlu0 %775
        %vm777 = vcmask 1041408
        %v778 = vrot.slane %v764, 6
        %v779 = vrot.slane %v768, 6
        %v780 = vsel %vm777, %v778, %v779
        %v781 = vrot.slane %v772, 6
        %v782 = vrot.slane %v776, 6
        %v783 = vsel %vm777, %v781, %v782
        %v790 = vmul.f32 %v467, %v778
        %v791 = vmul.f32 %v468, %v780
        %v792 = vmul.f32 %v469, %v779
        %v793 = vmul.f32 %v470, %v781
        %v794 = vmul.f32 %v471, %v783
        %v795 = vmul.f32 %v472, %v782
        %v802 = vrot.slane %v790, 2
        %v803 = vrot.slane %v791, 2
        %v804 = vsel %vm625, %v802, %v803
        %v805 = vrot.slane %v792, 2
        %v806 = vsel %vm625, %v803, %v805
        %v807 = vrot.slane %v793, 2
        %v808 = vrot.slane %v794, 2
        %v809 = vsel %vm625, %v807, %v808
        %v810 = vrot.slane %v795, 2
        %v811 = vsel %vm625, %v808, %v810
        %v816 = vsel %vm509, %v804, 0.0
        %v817 = vsel %vm509, %v806, 0.0
        %v818 = vadd.f32 %v816, %v817
        %v819 = vrot.slane %v818, 4
        %v820 = vadd.f32 %v818, %v819
        %v821 = vrot.slane %v820, 2
        %v822 = vadd.f32 %v820, %v821
        %v823 = vrot.slane %v822, 1
        %v824 = vadd.f32 %v822, %v823
        %v825 = vsel %vm509, %v809, 0.0
        %v826 = vsel %vm509, %v811, 0.0
        %v827 = vadd.f32 %v825, %v826
        %v828 = vrot.slane %v827, 4
        %v829 = vadd.f32 %v827, %v828
        %v830 = vrot.slane %v829, 2
        %v831 = vadd.f32 %v829, %v830
        %v832 = vrot.slane %v831, 1
        %v833 = vadd.f32 %v831, %v832
        %v834 = vld [vmem:[%s444] sm:$0xff]
        %v835 = vld [vmem:[%s444 + $0x8] sm:$0xff]
        %837 = vset.pattern.permute.xlu0 0
        %838 = vperm.xlu0 %837, %v834
        %v839 = vpop.permute.xlu0 %838
        %841 = vset.pattern.permute.xlu0 0
        %842 = vperm.xlu0 %841, %v835
        %v843 = vpop.permute.xlu0 %842
        %v844 = vrot.slane %v839, 6
        %v845 = vrot.slane %v843, 6
        %v846 = vsel %vm777, %v844, %v845
        %v850 = vmul.f32 %v467, %v844
        %v851 = vmul.f32 %v468, %v846
        %v852 = vmul.f32 %v469, %v845
        %v853 = vmul.f32 %v470, %v844
        %v854 = vmul.f32 %v471, %v846
        %v855 = vmul.f32 %v472, %v845
        %v862 = vrot.slane %v850, 2
        %v863 = vrot.slane %v851, 2
        %v864 = vsel %vm625, %v862, %v863
        %v865 = vrot.slane %v852, 2
        %v866 = vsel %vm625, %v863, %v865
        %v867 = vrot.slane %v853, 2
        %v868 = vrot.slane %v854, 2
        %v869 = vsel %vm625, %v867, %v868
        %v870 = vrot.slane %v855, 2
        %v871 = vsel %vm625, %v868, %v870
        %v876 = vsel %vm509, %v864, 0.0
        %v877 = vsel %vm509, %v866, 0.0
        %v878 = vadd.f32 %v876, %v877
        %v879 = vrot.slane %v878, 4
        %v880 = vadd.f32 %v878, %v879
        %v881 = vrot.slane %v880, 2
        %v882 = vadd.f32 %v880, %v881
        %v883 = vrot.slane %v882, 1
        %v884 = vadd.f32 %v882, %v883
        %v885 = vsel %vm509, %v869, 0.0
        %v886 = vsel %vm509, %v871, 0.0
        %v887 = vadd.f32 %v885, %v886
        %v888 = vrot.slane %v887, 4
        %v889 = vadd.f32 %v887, %v888
        %v890 = vrot.slane %v889, 2
        %v891 = vadd.f32 %v889, %v890
        %v892 = vrot.slane %v891, 1
        %v893 = vadd.f32 %v891, %v892
        %s894 = sld [smem:[#allocation5 + %s585]]
        %v895 = vstv %s894
        %v896 = vadd.f32 %v884, %v895
        %v897 = vadd.f32 %v893, %v895
        %v898 = vld [vmem:[%s449] sm:$0xff]
        %v899 = vld [vmem:[%s449 + $0x8] sm:$0xff]
        %v900 = vld [vmem:[%s449 + $0x10] sm:$0xff]
        %v901 = vld [vmem:[%s449 + $0x18] sm:$0xff]
        %v902 = vld [vmem:[%s454] sm:$0xff]
        %v903 = vld [vmem:[%s454 + $0x8] sm:$0xff]
        %v904 = vld [vmem:[%s454 + $0x10] sm:$0xff]
        %v905 = vld [vmem:[%s454 + $0x18] sm:$0xff]
        %vm908 = vcmask 1041409
        %v909 = vsel %vm908, %v897, %v896
        %v910 = vsel %vm509, %v909, 0
        %912 = vmatprep.subr.mxu0 0.0
        %913 = vmatpush1.msra.mxu0 %v902
        %914 = vmatprep.subr.mxu0 0.0
        %915 = vmatpush1.msra.mxu0 %v903
        %916 = vmatprep.subr.mxu0 0.0
        %917 = vmatpush1.msra.mxu0 %v904
        %918 = vmatprep.subr.mxu0 0.0
        %919 = vmatpush1.msra.mxu0 %v905
        %920 = vmatprep.subr.mxu0 0.0
        %921 = vmatpush1.msra.mxu0 0.0
        %922 = vmatprep.subr.mxu0 0.0
        %923 = vmatpush1.msra.mxu0 0.0
        %924 = vmatprep.subr.mxu0 0.0
        %925 = vmatpush1.msra.mxu0 0.0
        %926 = vmatprep.subr.mxu0 0.0
        %927 = vmatpush1.msra.mxu0 0.0
        %928 = vmatprep.subr.mxu0 0.0
        %929 = vmatpush1.msra.mxu0 0.0
        %930 = vmatprep.subr.mxu0 0.0
        %931 = vmatpush1.msra.mxu0 0.0
        %932 = vmatprep.subr.mxu0 0.0
        %933 = vmatpush1.msra.mxu0 0.0
        %934 = vmatprep.subr.mxu0 0.0
        %935 = vmatpush1.msra.mxu0 0.0
        %936 = vmatprep.subr.mxu0 0.0
        %937 = vmatpush1.msra.mxu0 0.0
        %938 = vmatprep.subr.mxu0 0.0
        %939 = vmatpush1.msra.mxu0 0.0
        %940 = vmatprep.subr.mxu0 0.0
        %941 = vmatpush1.msra.mxu0 0.0
        %942 = vmatprep.subr.mxu0 0.0
        %943 = vmatpush1.msra.mxu0 0.0
        %944 = vmatprep.subr.mxu0 0.0
        %945 = vmatpush1.msra.mxu0 0.0
        %946 = vmatprep.subr.mxu0 0.0
        %947 = vmatpush1.msra.mxu0 0.0
        %948 = vmatprep.subr.mxu0 0.0
        %949 = vmatpush1.msra.mxu0 0.0
        %950 = vmatprep.subr.mxu0 0.0
        %951 = vmatpush1.msra.mxu0 0.0
        %952 = vmatprep.subr.mxu0 0.0
        %953 = vmatpush1.msra.mxu0 0.0
        %954 = vmatprep.subr.mxu0 0.0
        %955 = vmatpush1.msra.mxu0 0.0
        %956 = vmatprep.subr.mxu0 0.0
        %957 = vmatpush1.msra.mxu0 0.0
        %958 = vmatprep.subr.mxu0 0.0
        %959 = vmatpush1.msra.mxu0 0.0
        %960 = vmatprep.subr.mxu0 0.0
        %961 = vmatpush1.msra.mxu0 0.0
        %962 = vmatprep.subr.mxu0 0.0
        %963 = vmatpush1.msra.mxu0 0.0
        %964 = vmatprep.subr.mxu0 0.0
        %965 = vmatpush1.msra.mxu0 0.0
        %966 = vmatprep.subr.mxu0 0.0
        %967 = vmatpush1.msra.mxu0 0.0
        %968 = vmatprep.subr.mxu0 0.0
        %969 = vmatpush1.msra.mxu0 0.0
        %970 = vmatprep.subr.mxu0 0.0
        %971 = vmatpush1.msra.mxu0 0.0
        %972 = vmatprep.subr.mxu0 0.0
        %973 = vmatpush1.msra.mxu0 0.0
        %974 = vmatprep.subr.mxu0 0.0
        %975 = vmatpush1.msra.mxu0 0.0
        %976 = vmatprep.mubr.f32.mxu0 0.0
        %977 = vmatmul.mubr.f32.gmra.mrb[0].mxu0 %v910
        %v978 = vpop.f32.mrb[0].mxu0
        %v979 = vadd.f32 0.0, %v978
        %v980 = vpop.f32.mrb[0].mxu0
        %981 = vdwg.mxu0
        %v984 = vsel %vm908, %v833, %v824
        %v985 = vsel %vm509, %v984, 0
        %987 = vmatprep.subr.mxu0 0.0
        %988 = vmatpush1.msra.mxu0 %v898
        %989 = vmatprep.subr.mxu0 0.0
        %990 = vmatpush1.msra.mxu0 %v899
        %991 = vmatprep.subr.mxu0 0.0
        %992 = vmatpush1.msra.mxu0 %v900
        %993 = vmatprep.subr.mxu0 0.0
        %994 = vmatpush1.msra.mxu0 %v901
        %995 = vmatprep.subr.mxu0 0.0
        %996 = vmatpush1.msra.mxu0 0.0
        %997 = vmatprep.subr.mxu0 0.0
        %998 = vmatpush1.msra.mxu0 0.0
        %999 = vmatprep.subr.mxu0 0.0
        %1000 = vmatpush1.msra.mxu0 0.0
        %1001 = vmatprep.subr.mxu0 0.0
        %1002 = vmatpush1.msra.mxu0 0.0
        %1003 = vmatprep.subr.mxu0 0.0
        %1004 = vmatpush1.msra.mxu0 0.0
        %1005 = vmatprep.subr.mxu0 0.0
        %1006 = vmatpush1.msra.mxu0 0.0
        %1007 = vmatprep.subr.mxu0 0.0
        %1008 = vmatpush1.msra.mxu0 0.0
        %1009 = vmatprep.subr.mxu0 0.0
        %1010 = vmatpush1.msra.mxu0 0.0
        %1011 = vmatprep.subr.mxu0 0.0
        %1012 = vmatpush1.msra.mxu0 0.0
        %1013 = vmatprep.subr.mxu0 0.0
        %1014 = vmatpush1.msra.mxu0 0.0
        %1015 = vmatprep.subr.mxu0 0.0
        %1016 = vmatpush1.msra.mxu0 0.0
        %1017 = vmatprep.subr.mxu0 0.0
        %1018 = vmatpush1.msra.mxu0 0.0
        %1019 = vmatprep.subr.mxu0 0.0
        %1020 = vmatpush1.msra.mxu0 0.0
        %1021 = vmatprep.subr.mxu0 0.0
        %1022 = vmatpush1.msra.mxu0 0.0
        %1023 = vmatprep.subr.mxu0 0.0
        %1024 = vmatpush1.msra.mxu0 0.0
        %1025 = vmatprep.subr.mxu0 0.0
        %1026 = vmatpush1.msra.mxu0 0.0
        %1027 = vmatprep.subr.mxu0 0.0
        %1028 = vmatpush1.msra.mxu0 0.0
        %1029 = vmatprep.subr.mxu0 0.0
        %1030 = vmatpush1.msra.mxu0 0.0
        %1031 = vmatprep.subr.mxu0 0.0
        %1032 = vmatpush1.msra.mxu0 0.0
        %1033 = vmatprep.subr.mxu0 0.0
        %1034 = vmatpush1.msra.mxu0 0.0
        %1035 = vmatprep.subr.mxu0 0.0
        %1036 = vmatpush1.msra.mxu0 0.0
        %1037 = vmatprep.subr.mxu0 0.0
        %1038 = vmatpush1.msra.mxu0 0.0
        %1039 = vmatprep.subr.mxu0 0.0
        %1040 = vmatpush1.msra.mxu0 0.0
        %1041 = vmatprep.subr.mxu0 0.0
        %1042 = vmatpush1.msra.mxu0 0.0
        %1043 = vmatprep.subr.mxu0 0.0
        %1044 = vmatpush1.msra.mxu0 0.0
        %1045 = vmatprep.subr.mxu0 0.0
        %1046 = vmatpush1.msra.mxu0 0.0
        %1047 = vmatprep.subr.mxu0 0.0
        %1048 = vmatpush1.msra.mxu0 0.0
        %1049 = vmatprep.subr.mxu0 0.0
        %1050 = vmatpush1.msra.mxu0 0.0
        %1051 = vmatprep.mubr.f32.mxu0 0.0
        %1052 = vmatmul.mubr.f32.gmra.mrb[0].mxu0 %v985
        %v1053 = vpop.f32.mrb[0].mxu0
        %v1054 = vadd.f32 %v979, %v1053
        %v1055 = vpop.f32.mrb[0].mxu0
        %1056 = vdwg.mxu0
        %v1057 = vld [vmem:[%s457] sm:$0x1]
        %v1059 = vlaneseq
        %v1060 = vshrl.u32 %v1059, 7
        %v1061 = vsub.s32 0, %v1060
        %v1062 = vrot.slane %v1057, %v1061
        %v1064 = vadd.f32 %v1054, %v1062
        %vm1065 = vcmask 58368
        %1066 = vst.msk [vmem:[%s423] sm:$0x3] %vm1065, %v1064
        %s1067 = sand.u32 %s246, 1
        %s1068 = scalar_lea.sflag [#allocation3], %s1067
        %s1069 = sand.u32 %s246, 1
        %s1070 = smul.addr %s1069, 2
        %s1071 = scalar_lea.vmem [#allocation7], %s1070
        // Predicated region
        $region61: #{tpu_custom_call.1} parent=51 // pred_check
          %p1072 = pneg %p256
        $region62: #{tpu_custom_call.1} parent=51 // pred_check_branch
          %1074 = sbr.rel (%p1072) target = $region64
        $region63: #{tpu_custom_call.1} parent=51 // pred_region
          %s1076 = ssub.s32 32, 32
          %1077 = vsyncadd %s1068, %s1076
          %s1078 = sadd.s32 %s29, %s28
          %s1079 = smul.addr %s1078, 32
          %s1080 = scalar_lea.hbm %s8, %s1079
          %s1082 = sshll.u32 %s1071, 4
          %s1083 = int_to_ptr.vmem [resolvable:$true] %s1082
          %1085 = dma.vmem_to_hbm [thread:$0]  %s1083, 32, %s1080, %s1068
        $region64: #{tpu_custom_call.1} parent=51 // pred_fallthru
          _
      $region52: #{tpu_custom_call.1} parent=5 // pred_fallthru
        _
      %p1086 = scmp.le.s32.totalorder 2, %s19
      // Predicated region
      $region65: #{tpu_custom_call.1} parent=5 // pred_check
        %p1087 = pneg %p1086
      $region66: #{tpu_custom_call.1} parent=5 // pred_check_branch
        %1089 = sbr.rel (%p1087) target = $region68
      $region67: #{tpu_custom_call.1} parent=5 // pred_region
        %s1090 = ssub.s32 %s19, 2
        // Predicated region
        $region69: #{tpu_custom_call.1} parent=67 // pred_check
          %p1091 = pneg %p262
        $region70: #{tpu_custom_call.1} parent=67 // pred_check_branch
          %1093 = sbr.rel (%p1091) target = $region72
        $region71: #{tpu_custom_call.1} parent=67 // pred_region
          %s1094 = sand.u32 %s247, 1
          %s1095 = scalar_lea.sflag [#allocation3], %s1094
          %s1096 = sand.u32 %s247, 1
          %s1097 = smul.addr %s1096, 2
          %s1098 = scalar_lea.vmem [#allocation7], %s1097
          %1099 = dma.done %s1095, 32
        $region72: #{tpu_custom_call.1} parent=67 // pred_fallthru
          _
      $region68: #{tpu_custom_call.1} parent=5 // pred_fallthru
        _
    $region6: #{tpu_custom_call.1} parent=1 // loop_footer
      %s23 = sadd.s32 1, %s19
    $region7: #{tpu_custom_call.1} parent=1 // loop_footer_branch
      %18 = sbr.rel target = $region3
    $region8: #{tpu_custom_call.1} parent=1 // loop_exit
      _
    %1100 = vsyncpa [#allocation3], 1
    %s1101 = scalar_lea.sflag [#allocation3], 1
    %1102 = vsyncpa %s1101, 1
    %1103 = vsyncpa [#allocation4], 1
    %s1104 = scalar_lea.sflag [#allocation4], 1
    %1105 = vsyncpa %s1104, 1
    %1106 = vsyncpa [#allocation6], 1

</llo_original>
